<compile_context>
chip_gen: v7x
topology: tpu7x:2x2x1
jax: 0.10.0
libtpu: 0.0.40
codegen_flags: <defaults>
</compile_context>

<pallas_src>
import jax
import jax.numpy as jnp
from jax.experimental import pallas as pl
from jax.experimental.pallas import tpu as pltpu

N_ATTRIBUTES = 6
N_OUTPUTS = 1

ROW_WIDTH = 384                           # lcm(N_ATTRIBUTES, 128) lanes per packed row
EX_PER_ROW = ROW_WIDTH // N_ATTRIBUTES    # 64 examples per packed row


def slp_kernel(x_ref, w_ref, b_ref, o_ref):
    # x_ref: (TR, 384) f32 VMEM -- TR packed rows, 64 examples each (lane-dense)
    # w_ref: (384, 64) f32 VMEM -- block weight, W[6*j + k, j] = weight[k]
    # b_ref: (1,)      f32 SMEM -- scalar bias
    # o_ref: (TR, 64)  f32 VMEM -- one logit per example of each packed row
    logits = jnp.dot(x_ref[...], w_ref[...], preferred_element_type=jnp.float32)
    o_ref[...] = jax.nn.sigmoid(logits + b_ref[0]).astype(o_ref.dtype)


def _round_up(n, m):
    return ((n + m - 1) // m) * m


def _vmem_budget_bytes():
    # Size the per-step working set from the chip's VMEM (v7x: 64 MiB per
    # TensorCore; v5e/v6e: 128 MiB), with generous headroom.
    try:
        phys = pltpu.get_tpu_info().vmem_capacity_bytes
    except Exception:
        phys = 64 << 20                      # assume the smallest (v7x per-TC)
    return max(8 << 20, min(phys // 3, 32 << 20))


def _choose_rows(num_rows, budget_bytes, max_rows_per_step):
    # VMEM per packed row: double-buffered f32 input (384 lanes) +
    # double-buffered f32 output (64 lanes, padded to 128 in VMEM).
    bytes_per_row = 2 * ROW_WIDTH * 4 + 2 * 128 * 4          # 4096 B / row
    tr_cap = max(8, (budget_bytes // bytes_per_row) // 8 * 8)
    # Payload size first (>= ~3 MB per step beats the ~0.35 us step overhead),
    # then >= 8 grid steps once the batch is big enough to afford both
    # (pipelining + v7x megacore sharding).
    tr = max(2048, _round_up(pl.cdiv(num_rows, 8), 8))
    tr = min(tr, tr_cap)
    if max_rows_per_step is not None:
        tr = min(tr, max(8, _round_up(max_rows_per_step, 8)))
    if tr >= num_rows:
        tr = num_rows            # single full-extent block (always a legal dim)
    return tr


def single_layer_perceptron(x, weight, bias, *, max_rows_per_step=None):
    """sigmoid(x @ weight.T + bias).  x: (B, 6) f32, weight: (1, 6) (PyTorch
    nn.Linear layout), bias: (1,).  Returns (B, 1)."""
    B, F = x.shape
    assert F == N_ATTRIBUTES
    assert weight.shape == (N_OUTPUTS, N_ATTRIBUTES)
    assert bias.shape == (N_OUTPUTS,)

    # Pack 64 examples per 384-lane row.  Pure metadata reshape when
    # B % 64 == 0; otherwise one pad-copy of x.
    b_pad = _round_up(B, EX_PER_ROW)
    if b_pad != B:
        x = jnp.pad(x, ((0, b_pad - B), (0, 0)))
    num_rows = b_pad // EX_PER_ROW
    x_packed = x.reshape(num_rows, ROW_WIDTH)

    budget = _vmem_budget_bytes()
    tr = _choose_rows(num_rows, budget, max_rows_per_step)
    num_tiles = pl.cdiv(num_rows, tr)

    # Block weight so (x_row @ W)[j] is the 6-wide dot for example j of that
    # packed row: W[6*j + k, j] = weight[0, k].
    eye = jnp.eye(EX_PER_ROW, dtype=x.dtype)
    w_mat = (eye[:, None, :]
             * weight.reshape(1, N_ATTRIBUTES, 1).astype(x.dtype)
             ).reshape(ROW_WIDTH, EX_PER_ROW)

    # Raise the scoped VMEM limit to cover the double buffers (+ slack), but
    # stay comfortably under every generation's physical VMEM (v7x = 64 MiB).
    need = (2 * tr * ROW_WIDTH * 4          # input double buffer
            + 2 * tr * 128 * 4              # output double buffer (lane-padded)
            + 2 * ROW_WIDTH * 128 * 4       # resident weight (lane-padded)
            + (2 << 20))                    # slack
    vmem_limit = int(min(max(need, 32 << 20), 40 << 20))

    out = pl.pallas_call(
        slp_kernel,
        out_shape=jax.ShapeDtypeStruct((num_tiles * tr, EX_PER_ROW), x.dtype),
        grid_spec=pltpu.PrefetchScalarGridSpec(
            num_scalar_prefetch=0,
            grid=(num_tiles,),
            in_specs=[
                # Lane-dense packed input rows, tiled over the batch.
                pl.BlockSpec((tr, ROW_WIDTH), lambda i: (i, 0)),
                # Full block-weight matrix, resident across all grid steps.
                pl.BlockSpec((ROW_WIDTH, EX_PER_ROW), lambda i: (0, 0)),
                # Scalar bias in SMEM.
                pl.BlockSpec(memory_space=pltpu.MemorySpace.SMEM),
            ],
            out_specs=pl.BlockSpec((tr, EX_PER_ROW), lambda i: (i, 0)),
        ),
        compiler_params=pltpu.CompilerParams(
            dimension_semantics=("parallel",),
            vmem_limit_bytes=vmem_limit,
        ),
        cost_estimate=pl.CostEstimate(
            flops=2 * N_ATTRIBUTES * b_pad,
            transcendentals=b_pad,
            bytes_accessed=(N_ATTRIBUTES + 1) * 4 * b_pad + ROW_WIDTH * EX_PER_ROW * 4,
        ),
    )(x_packed, w_mat, bias.astype(jnp.float32))

    # (num_tiles*tr, 64) -> flat example order -> (B, 1); examples past B
    # (pad + over-allocated trailing tile) are sliced off here.
    return out.reshape(num_tiles * tr * EX_PER_ROW, 1)[:B]


if __name__ == "__main__":
    key = jax.random.PRNGKey(0)
    k_w, k_b, k_x1, k_x2, k_x3 = jax.random.split(key, 5)

    # Deterministic parameters, matching nn.Linear's U(-1/sqrt(fan_in), ...).
    bound = 1.0 / (N_ATTRIBUTES ** 0.5)
    weight = jax.random.uniform(k_w, (N_OUTPUTS, N_ATTRIBUTES), dtype=jnp.float32,
                                minval=-bound, maxval=bound)
    bias = jax.random.uniform(k_b, (N_OUTPUTS,), dtype=jnp.float32,
                              minval=-bound, maxval=bound)

    def reference(x):
        return jax.nn.sigmoid(x @ weight.T + bias)

    # Case 1: B a multiple of 64 (copy-free packing), single tile.
    x1 = jax.random.normal(k_x1, (64, N_ATTRIBUTES), dtype=jnp.float32)
    o1 = jax.block_until_ready(single_layer_perceptron(x1, weight, bias))
    assert o1.shape == (64, N_OUTPUTS)
    assert jnp.allclose(o1, reference(x1), atol=1e-4, rtol=1e-4)

    # Case 2: ragged batch (pad path) with a partially filled packed row.
    x2 = jax.random.normal(k_x2, (200, N_ATTRIBUTES), dtype=jnp.float32)
    o2 = jax.block_until_ready(single_layer_perceptron(x2, weight, bias))
    assert o2.shape == (200, N_OUTPUTS)
    assert jnp.allclose(o2, reference(x2), atol=1e-4, rtol=1e-4)

    # Case 3: multi-tile grid with a partial trailing input block (tile size
    # forced small to exercise the pipelined / parallel grid path).
    x3 = jax.random.normal(k_x3, (2688, N_ATTRIBUTES), dtype=jnp.float32)
    o3 = jax.block_until_ready(
        single_layer_perceptron(x3, weight, bias, max_rows_per_step=8))
    assert o3.shape == (2688, N_OUTPUTS)
    assert jnp.allclose(o3, reference(x3), atol=1e-4, rtol=1e-4)

    print("KERNEL_OK")
</pallas_src>

<mosaic_0001>
module attributes {stable_mosaic.version = 11 : i64} {
  func.func @slp_kernel(%arg0: i32, %arg1: memref<1x384xf32, #tpu.memory_space<vmem>>, %arg2: memref<384x64xf32, #tpu.memory_space<vmem>>, %arg3: memref<1xf32, #tpu.memory_space<smem>>, %arg4: memref<1x64xf32, #tpu.memory_space<vmem>>) attributes {dimension_semantics = [#tpu.dimension_semantics<parallel>], iteration_bounds = array<i64: 1>, scalar_prefetch = 0 : i64, scratch_operands = 0 : i64, tpu.core_type = #tpu.core_type<tc>, window_params = [{transform_indices = @transform_0, window_bounds = array<i64: 1, 384>}, {pipeline_mode = #tpu.pipeline_mode<synchronous>, transform_indices = @transform_1, window_bounds = array<i64: 384, 64>}, {transform_indices = @transform_2, window_bounds = array<i64: 1>}, {transform_indices = @transform_3, window_bounds = array<i64: 1, 64>}]} {
    %c0 = arith.constant 0 : index
    %c0_0 = arith.constant 0 : index
    %0 = vector.load %arg1[%c0, %c0_0] : memref<1x384xf32, #tpu.memory_space<vmem>>, vector<1x384xf32>
    %c0_1 = arith.constant 0 : index
    %c0_2 = arith.constant 0 : index
    %1 = vector.load %arg2[%c0_1, %c0_2] : memref<384x64xf32, #tpu.memory_space<vmem>>, vector<384x64xf32>
    %cst = arith.constant dense<0.000000e+00> : vector<1x64xf32>
    %2 = tpu.matmul %0, %1, %cst {dimension_numbers = #tpu.dot_dimension_numbers<[1], [0], [0], [1], [0, 0, 1, 1], [], []>} : vector<1x384xf32>, vector<384x64xf32>, vector<1x64xf32> -> vector<1x64xf32>
    %c0_3 = arith.constant 0 : index
    %3 = memref.load %arg3[%c0_3] : memref<1xf32, #tpu.memory_space<smem>>
    %4 = vector.broadcast %3 : f32 to vector<1x64xf32>
    %5 = arith.addf %2, %4 : vector<1x64xf32>
    %6 = arith.negf %5 : vector<1x64xf32>
    %7 = math.exp %6 : vector<1x64xf32>
    %cst_4 = arith.constant 1.000000e+00 : f32
    %8 = vector.broadcast %cst_4 : f32 to vector<1x64xf32>
    %9 = arith.addf %8, %7 : vector<1x64xf32>
    %10 = arith.divf %8, %9 : vector<1x64xf32>
    %c0_5 = arith.constant 0 : index
    %c0_6 = arith.constant 0 : index
    %11 = vector.load %arg4[%c0_5, %c0_6] : memref<1x64xf32, #tpu.memory_space<vmem>>, vector<1x64xf32>
    tpu.vector_store %arg4[%c0_5, %c0_6], %10 {strides = array<i32>} : memref<1x64xf32, #tpu.memory_space<vmem>>, vector<1x64xf32>,
    return
  }
  func.func @transform_0(%arg0: i32) -> (i32, i32) {
    %c0_i32 = arith.constant 0 : i32
    %c0_i32_0 = arith.constant 0 : i32
    return %arg0, %c0_i32 : i32, i32
  }
  func.func @transform_1(%arg0: i32) -> (i32, i32) {
    %c0_i32 = arith.constant 0 : i32
    %c0_i32_0 = arith.constant 0 : i32
    %c0_i32_1 = arith.constant 0 : i32
    return %c0_i32, %c0_i32_0 : i32, i32
  }
  func.func @transform_2(%arg0: i32) -> i32 {
    %c0_i32 = arith.constant 0 : i32
    %c0_i32_0 = arith.constant 0 : i32
    return %c0_i32 : i32
  }
  func.func @transform_3(%arg0: i32) -> (i32, i32) {
    %c0_i32 = arith.constant 0 : i32
    %c0_i32_0 = arith.constant 0 : i32
    return %arg0, %c0_i32 : i32, i32
  }
}

</mosaic_0001>

<llo_original>
// kernel: tpu_custom_call.1
$region0: #{tpu_custom_call.1}
  #allocation0 [shape = 'u32[]', space=smem, size = 0x4, offset = 0x4, fixed_abs, tag = 'smem constant byte address 0x4 - core index']
  #allocation1 [shape = 'u32[144,128]{1,0:T(1,128)}', space=vmem, size = 0x12000, scoped, tag = 'internal scratch']
  #allocation2 [shape = 'f32[1]{0:T(128)S(6)}', space=smem, size = 0x200, scoped, tag = 'scoped memory for tpu_custom_call.1']
  %s0 = inlined_call_operand.vmem [shape: f32[1,384], index: 0, kind: input, shape index: {}]
  %s1 = inlined_call_operand.vmem [shape: f32[384,64], index: 1, kind: input, shape index: {}]
  %s2 = inlined_call_operand.<no memory space> [shape: f32[1], index: 2, kind: input, shape index: {}]
  %s3 = inlined_call_operand.hbm [shape: f32[1,64], index: 3, kind: output, shape index: {}]
  %s4 = sld [smem:[#allocation0]]
  $region22: #{tpu_custom_call.1} parent=0
    _
  %s6 = ssub.s32 1, %s4
  %s7 = scalar_select 0, %s6, %s4
  %8 = sst [smem:[#allocation2]] %s2
  $region1: #{tpu_custom_call.1} parent=0
    #allocation3 [shape = 'u8[512]{0}', space=vmem, size = 0x400, scoped, tag = 'output window, operand 0, single buffered']
    #allocation4 [shape = 's32[1]{0}', space=sflag, size = 0x4, scoped, tag = 'scoped memory for tpu_custom_call.1']
    %9 = vsyncpa [#allocation4], 0
    // Predicated region
    $region2: #{tpu_custom_call.1} parent=1 // pred_check
      _
    $region3: #{tpu_custom_call.1} parent=1 // pred_check_branch
      %11 = sbr.rel (0) target = $region5
    $region4: #{tpu_custom_call.1} parent=1 // pred_region
      _
    $region5: #{tpu_custom_call.1} parent=1 // pred_fallthru
      _
    // Predicated region
    $region6: #{tpu_custom_call.1} parent=1 // pred_check
      _
    $region7: #{tpu_custom_call.1} parent=1 // pred_check_branch
      %13 = sbr.rel (0) target = $region9
    $region8: #{tpu_custom_call.1} parent=1 // pred_region
      _
    $region9: #{tpu_custom_call.1} parent=1 // pred_fallthru
      _
    // Predicated region
    $region10: #{tpu_custom_call.1} parent=1 // pred_check
      _
    $region11: #{tpu_custom_call.1} parent=1 // pred_check_branch
      %15 = sbr.rel (0) target = $region13
    $region12: #{tpu_custom_call.1} parent=1 // pred_region
      _
    $region13: #{tpu_custom_call.1} parent=1 // pred_fallthru
      _
    %v16 = vld [vmem:[%s0] sm:$0x7]
    %v17 = vld [vmem:[%s1] sm:$0xff]
    %v18 = vld [vmem:[%s1 + $0x8] sm:$0xff]
    %v19 = vld [vmem:[%s1 + $0x10] sm:$0xff]
    %v20 = vld [vmem:[%s1 + $0x18] sm:$0xff]
    %v21 = vld [vmem:[%s1 + $0x20] sm:$0xff]
    %v22 = vld [vmem:[%s1 + $0x28] sm:$0xff]
    %v23 = vld [vmem:[%s1 + $0x30] sm:$0xff]
    %v24 = vld [vmem:[%s1 + $0x38] sm:$0xff]
    %v25 = vld [vmem:[%s1 + $0x40] sm:$0xff]
    %v26 = vld [vmem:[%s1 + $0x48] sm:$0xff]
    %v27 = vld [vmem:[%s1 + $0x50] sm:$0xff]
    %v28 = vld [vmem:[%s1 + $0x58] sm:$0xff]
    %v29 = vld [vmem:[%s1 + $0x60] sm:$0xff]
    %v30 = vld [vmem:[%s1 + $0x68] sm:$0xff]
    %v31 = vld [vmem:[%s1 + $0x70] sm:$0xff]
    %v32 = vld [vmem:[%s1 + $0x78] sm:$0xff]
    %v33 = vld [vmem:[%s1 + $0x80] sm:$0xff]
    %v34 = vld [vmem:[%s1 + $0x88] sm:$0xff]
    %v35 = vld [vmem:[%s1 + $0x90] sm:$0xff]
    %v36 = vld [vmem:[%s1 + $0x98] sm:$0xff]
    %v37 = vld [vmem:[%s1 + $0xa0] sm:$0xff]
    %v38 = vld [vmem:[%s1 + $0xa8] sm:$0xff]
    %v39 = vld [vmem:[%s1 + $0xb0] sm:$0xff]
    %v40 = vld [vmem:[%s1 + $0xb8] sm:$0xff]
    %v41 = vld [vmem:[%s1 + $0xc0] sm:$0xff]
    %v42 = vld [vmem:[%s1 + $0xc8] sm:$0xff]
    %v43 = vld [vmem:[%s1 + $0xd0] sm:$0xff]
    %v44 = vld [vmem:[%s1 + $0xd8] sm:$0xff]
    %v45 = vld [vmem:[%s1 + $0xe0] sm:$0xff]
    %v46 = vld [vmem:[%s1 + $0xe8] sm:$0xff]
    %v47 = vld [vmem:[%s1 + $0xf0] sm:$0xff]
    %v48 = vld [vmem:[%s1 + $0xf8] sm:$0xff]
    %v49 = vld [vmem:[%s1 + $0x100] sm:$0xff]
    %v50 = vld [vmem:[%s1 + $0x108] sm:$0xff]
    %v51 = vld [vmem:[%s1 + $0x110] sm:$0xff]
    %v52 = vld [vmem:[%s1 + $0x118] sm:$0xff]
    %v53 = vld [vmem:[%s1 + $0x120] sm:$0xff]
    %v54 = vld [vmem:[%s1 + $0x128] sm:$0xff]
    %v55 = vld [vmem:[%s1 + $0x130] sm:$0xff]
    %v56 = vld [vmem:[%s1 + $0x138] sm:$0xff]
    %v57 = vld [vmem:[%s1 + $0x140] sm:$0xff]
    %v58 = vld [vmem:[%s1 + $0x148] sm:$0xff]
    %v59 = vld [vmem:[%s1 + $0x150] sm:$0xff]
    %v60 = vld [vmem:[%s1 + $0x158] sm:$0xff]
    %v61 = vld [vmem:[%s1 + $0x160] sm:$0xff]
    %v62 = vld [vmem:[%s1 + $0x168] sm:$0xff]
    %v63 = vld [vmem:[%s1 + $0x170] sm:$0xff]
    %v64 = vld [vmem:[%s1 + $0x178] sm:$0xff]
    %s65 = sld [smem:[#allocation2]]
    %v66 = vstv %s65
    %v68 = vlaneseq
    %v69 = vshrl.u32 %v68, 7
    %v70 = vsub.s32 0, %v69
    %v71 = vrot.slane %v16, %v70
    %v72 = vlaneseq
    %v73 = vshrl.u32 %v72, 7
    %v74 = vsub.s32 1, %v73
    %v75 = vrot.slane %v16, %v74
    %v76 = vlaneseq
    %v77 = vshrl.u32 %v76, 7
    %v78 = vsub.s32 2, %v77
    %v79 = vrot.slane %v16, %v78
    %83 = vmatprep.subr.mxu0 0.0
    %84 = vmatpush1.msra.mxu0 %v17
    %85 = vmatprep.subr.mxu0 0.0
    %86 = vmatpush1.msra.mxu0 %v18
    %87 = vmatprep.subr.mxu0 0.0
    %88 = vmatpush1.msra.mxu0 %v19
    %89 = vmatprep.subr.mxu0 0.0
    %90 = vmatpush1.msra.mxu0 %v20
    %91 = vmatprep.subr.mxu0 0.0
    %92 = vmatpush1.msra.mxu0 %v21
    %93 = vmatprep.subr.mxu0 0.0
    %94 = vmatpush1.msra.mxu0 %v22
    %95 = vmatprep.subr.mxu0 0.0
    %96 = vmatpush1.msra.mxu0 %v23
    %97 = vmatprep.subr.mxu0 0.0
    %98 = vmatpush1.msra.mxu0 %v24
    %99 = vmatprep.subr.mxu0 0.0
    %100 = vmatpush1.msra.mxu0 %v25
    %101 = vmatprep.subr.mxu0 0.0
    %102 = vmatpush1.msra.mxu0 %v26
    %103 = vmatprep.subr.mxu0 0.0
    %104 = vmatpush1.msra.mxu0 %v27
    %105 = vmatprep.subr.mxu0 0.0
    %106 = vmatpush1.msra.mxu0 %v28
    %107 = vmatprep.subr.mxu0 0.0
    %108 = vmatpush1.msra.mxu0 %v29
    %109 = vmatprep.subr.mxu0 0.0
    %110 = vmatpush1.msra.mxu0 %v30
    %111 = vmatprep.subr.mxu0 0.0
    %112 = vmatpush1.msra.mxu0 %v31
    %113 = vmatprep.subr.mxu0 0.0
    %114 = vmatpush1.msra.mxu0 %v32
    %115 = vmatprep.subr.mxu0 0.0
    %116 = vmatpush1.msra.mxu0 %v33
    %117 = vmatprep.subr.mxu0 0.0
    %118 = vmatpush1.msra.mxu0 %v34
    %119 = vmatprep.subr.mxu0 0.0
    %120 = vmatpush1.msra.mxu0 %v35
    %121 = vmatprep.subr.mxu0 0.0
    %122 = vmatpush1.msra.mxu0 %v36
    %123 = vmatprep.subr.mxu0 0.0
    %124 = vmatpush1.msra.mxu0 %v37
    %125 = vmatprep.subr.mxu0 0.0
    %126 = vmatpush1.msra.mxu0 %v38
    %127 = vmatprep.subr.mxu0 0.0
    %128 = vmatpush1.msra.mxu0 %v39
    %129 = vmatprep.subr.mxu0 0.0
    %130 = vmatpush1.msra.mxu0 %v40
    %131 = vmatprep.subr.mxu0 0.0
    %132 = vmatpush1.msra.mxu0 %v41
    %133 = vmatprep.subr.mxu0 0.0
    %134 = vmatpush1.msra.mxu0 %v42
    %135 = vmatprep.subr.mxu0 0.0
    %136 = vmatpush1.msra.mxu0 %v43
    %137 = vmatprep.subr.mxu0 0.0
    %138 = vmatpush1.msra.mxu0 %v44
    %139 = vmatprep.subr.mxu0 0.0
    %140 = vmatpush1.msra.mxu0 %v45
    %141 = vmatprep.subr.mxu0 0.0
    %142 = vmatpush1.msra.mxu0 %v46
    %143 = vmatprep.subr.mxu0 0.0
    %144 = vmatpush1.msra.mxu0 %v47
    %145 = vmatprep.subr.mxu0 0.0
    %146 = vmatpush1.msra.mxu0 %v48
    %147 = vmatprep.mubr.f32.mxu0 %v75
    %148 = vmatmul.mubr.f32.gmra.mrb[0].mxu0 %v71
    %v149 = vpop.f32.mrb[0].mxu0
    %v150 = vadd.f32 %v66, %v149
    %v151 = vpop.f32.mrb[0].mxu0
    %152 = vdwg.mxu0
    %153 = vmatprep.subr.mxu0 0.0
    %154 = vmatpush1.msra.mxu0 %v49
    %155 = vmatprep.subr.mxu0 0.0
    %156 = vmatpush1.msra.mxu0 %v50
    %157 = vmatprep.subr.mxu0 0.0
    %158 = vmatpush1.msra.mxu0 %v51
    %159 = vmatprep.subr.mxu0 0.0
    %160 = vmatpush1.msra.mxu0 %v52
    %161 = vmatprep.subr.mxu0 0.0
    %162 = vmatpush1.msra.mxu0 %v53
    %163 = vmatprep.subr.mxu0 0.0
    %164 = vmatpush1.msra.mxu0 %v54
    %165 = vmatprep.subr.mxu0 0.0
    %166 = vmatpush1.msra.mxu0 %v55
    %167 = vmatprep.subr.mxu0 0.0
    %168 = vmatpush1.msra.mxu0 %v56
    %169 = vmatprep.subr.mxu0 0.0
    %170 = vmatpush1.msra.mxu0 %v57
    %171 = vmatprep.subr.mxu0 0.0
    %172 = vmatpush1.msra.mxu0 %v58
    %173 = vmatprep.subr.mxu0 0.0
    %174 = vmatpush1.msra.mxu0 %v59
    %175 = vmatprep.subr.mxu0 0.0
    %176 = vmatpush1.msra.mxu0 %v60
    %177 = vmatprep.subr.mxu0 0.0
    %178 = vmatpush1.msra.mxu0 %v61
    %179 = vmatprep.subr.mxu0 0.0
    %180 = vmatpush1.msra.mxu0 %v62
    %181 = vmatprep.subr.mxu0 0.0
    %182 = vmatpush1.msra.mxu0 %v63
    %183 = vmatprep.subr.mxu0 0.0
    %184 = vmatpush1.msra.mxu0 %v64
    %185 = vmatprep.subr.mxu0 0.0
    %186 = vmatpush1.msra.mxu0 0.0
    %187 = vmatprep.subr.mxu0 0.0
    %188 = vmatpush1.msra.mxu0 0.0
    %189 = vmatprep.subr.mxu0 0.0
    %190 = vmatpush1.msra.mxu0 0.0
    %191 = vmatprep.subr.mxu0 0.0
    %192 = vmatpush1.msra.mxu0 0.0
    %193 = vmatprep.subr.mxu0 0.0
    %194 = vmatpush1.msra.mxu0 0.0
    %195 = vmatprep.subr.mxu0 0.0
    %196 = vmatpush1.msra.mxu0 0.0
    %197 = vmatprep.subr.mxu0 0.0
    %198 = vmatpush1.msra.mxu0 0.0
    %199 = vmatprep.subr.mxu0 0.0
    %200 = vmatpush1.msra.mxu0 0.0
    %201 = vmatprep.subr.mxu0 0.0
    %202 = vmatpush1.msra.mxu0 0.0
    %203 = vmatprep.subr.mxu0 0.0
    %204 = vmatpush1.msra.mxu0 0.0
    %205 = vmatprep.subr.mxu0 0.0
    %206 = vmatpush1.msra.mxu0 0.0
    %207 = vmatprep.subr.mxu0 0.0
    %208 = vmatpush1.msra.mxu0 0.0
    %209 = vmatprep.subr.mxu0 0.0
    %210 = vmatpush1.msra.mxu0 0.0
    %211 = vmatprep.subr.mxu0 0.0
    %212 = vmatpush1.msra.mxu0 0.0
    %213 = vmatprep.subr.mxu0 0.0
    %214 = vmatpush1.msra.mxu0 0.0
    %215 = vmatprep.subr.mxu0 0.0
    %216 = vmatpush1.msra.mxu0 0.0
    %217 = vmatprep.mubr.f32.mxu0 0.0
    %218 = vmatmul.mubr.f32.gmra.mrb[0].mxu0 %v79
    %v219 = vpop.f32.mrb[0].mxu0
    %v220 = vadd.f32 %v150, %v219
    %v221 = vpop.f32.mrb[0].mxu0
    %222 = vdwg.mxu0
    %v223 = vxor.u32 %v220, 2147483648
    %v224 = vmul.f32 %v223, 1.442695
    %v225 = vpow.pop %v224
    %v226 = vadd.f32 %v225, 1.0
    %v227 = vrcp.pop %v226
    %v228 = vmul.f32 1.0, %v227
    %vm229 = vcmask 516096
    %230 = vst.msk [vmem:[#allocation3] sm:$0x1] %vm229, %v228
    // Predicated region
    $region14: #{tpu_custom_call.1} parent=1 // pred_check
      _
    $region15: #{tpu_custom_call.1} parent=1 // pred_check_branch
      %232 = sbr.rel (0) target = $region17
    $region16: #{tpu_custom_call.1} parent=1 // pred_region
      %s234 = ssub.s32 16, 16
      %235 = vsyncadd [#allocation4], %s234
      %s237 = sshll.u32 [#allocation3], 4
      %s238 = int_to_ptr.vmem [resolvable:$true] %s237
      %240 = dma.vmem_to_hbm [thread:$0]  %s238, 16, %s3, [#allocation4]
    $region17: #{tpu_custom_call.1} parent=1 // pred_fallthru
      _
    // Predicated region
    $region18: #{tpu_custom_call.1} parent=1 // pred_check
      _
    $region19: #{tpu_custom_call.1} parent=1 // pred_check_branch
      %242 = sbr.rel (0) target = $region21
    $region20: #{tpu_custom_call.1} parent=1 // pred_region
      %243 = dma.done [#allocation4], 16
    $region21: #{tpu_custom_call.1} parent=1 // pred_fallthru
      _
    %244 = vsyncpa [#allocation4], 1

</llo_original>
